<compile_context>
chip_gen: v6e
topology: v6e:2x2x1
jax: 0.10.0
libtpu: 0.0.40
codegen_flags: <defaults>
</compile_context>

<pallas_src>
import functools
import math

import jax
import jax.numpy as jnp
from jax import lax
from jax.experimental import pallas as pl
from jax.experimental.pallas import tpu as pltpu


def _round_up(n, m):
    return ((n + m - 1) // m) * m


def _pick_divisor_tile(total, target, align=128):
    """Largest multiple of `align` that divides `total` and is <= target."""
    n = total // align
    for d in range(n, 0, -1):
        if n % d == 0 and d * align <= target:
            return d * align
    return align


def _tpu_config():
    """(tile_rows, tile_h, vmem_limit_bytes) — generation-aware, safe fallback."""
    try:
        vmem_cap = pltpu.get_tpu_info().vmem_capacity_bytes
    except Exception:
        vmem_cap = 64 * 1024 * 1024
    if vmem_cap >= 96 * 1024 * 1024:
        # v5e / v6e: 128 MiB physical VMEM -> big row tiles, ~96 MiB budget.
        return 768, 512, 96 * 1024 * 1024
    # v7x: 64 MiB per TensorCore -> leave headroom for compiler scratch / DMA.
    return 512, 256, 48 * 1024 * 1024


def _ff_kernel(x_ref, g_ref, beta_ref, w1_ref, b1_ref, w2_ref, b2_ref,
               o_ref, acc_ref, xn_ref, *, d_valid):
    """One (row-tile, hidden-tile) grid step.

    Grid = (row tiles, hidden tiles). The hidden axis is a reduction for the
    second matmul: partials accumulate into acc_ref; the output block is
    written only on the last hidden step. LayerNorm runs only at h_step == 0
    and is cached (bf16) in xn_ref for all subsequent hidden steps.
    """
    h_step = pl.program_id(1)

    @pl.when(h_step == 0)
    def _():
        # ---- LayerNorm, once per row tile (eps=1e-5, biased variance) ----
        # Padded x columns are zero, so sum(x) / sum(x^2) over Dp equal the
        # sums over the valid D columns; var = E[x^2] - mean^2 needs no mask.
        x = x_ref[...].astype(jnp.float32)                       # (TM, Dp)
        inv_d = 1.0 / float(d_valid)
        mean = jnp.sum(x, axis=-1, keepdims=True) * inv_d
        ex2 = jnp.sum(x * x, axis=-1, keepdims=True) * inv_d
        var = ex2 - mean * mean
        xn = (x - mean) * lax.rsqrt(var + 1e-5)
        # Padded gamma/beta are zero -> padded lanes of xn become exactly 0,
        # so they contribute nothing to the first matmul.
        xn_ref[...] = (xn * g_ref[...] + beta_ref[...]).astype(jnp.bfloat16)
        acc_ref[...] = jnp.zeros_like(acc_ref)

    # ---- Linear(dim -> hidden tile): bf16 MXU inputs, f32 accumulation ----
    h = jnp.dot(xn_ref[...], w1_ref[...],
                preferred_element_type=jnp.float32) + b1_ref[...]

    # ---- GELU (exact erf form = PyTorch nn.GELU default) ----
    # TODO(synk): switch to tanh-approx GELU (EUP slot) if exact-erf parity
    # with PyTorch is not required; it frees VALU bundles.
    h = 0.5 * h * (1.0 + lax.erf(h * (1.0 / math.sqrt(2.0))))

    # ---- Linear(hidden tile -> dim): accumulate over hidden tiles ----
    acc_ref[...] += jnp.dot(h.astype(jnp.bfloat16), w2_ref[...],
                            preferred_element_type=jnp.float32)

    @pl.when(h_step == pl.num_programs(1) - 1)
    def _():
        o_ref[...] = (acc_ref[...] + b2_ref[...]).astype(o_ref.dtype)


def prepare_params(gamma, beta, w1, b1, w2, b2, *, tile_h=None):
    """Pad + cast parameters ONCE (lane-dense, bf16 weights). Reuse across calls."""
    if tile_h is None:
        _, tile_h, _ = _tpu_config()
    D, H = w1.shape
    Dp = _round_up(D, 128)
    Hp = _round_up(H, 128)
    th = _pick_divisor_tile(Hp, tile_h)
    return dict(
        D=D, H=H, Dp=Dp, Hp=Hp, th=th,
        gamma=jnp.pad(gamma.astype(jnp.float32), (0, Dp - D)).reshape(1, Dp),
        beta=jnp.pad(beta.astype(jnp.float32), (0, Dp - D)).reshape(1, Dp),
        w1=jnp.pad(w1.astype(jnp.bfloat16), ((0, Dp - D), (0, Hp - H))),
        b1=jnp.pad(b1.astype(jnp.float32), (0, Hp - H)).reshape(1, Hp),
        w2=jnp.pad(w2.astype(jnp.bfloat16), ((0, Hp - H), (0, Dp - D))),
        b2=jnp.pad(b2.astype(jnp.float32), (0, Dp - D)).reshape(1, Dp),
    )


def feedforward_pallas(x, params, *, tile_rows=None, vmem_limit=None):
    """x: (..., D). Returns same shape/dtype as x."""
    orig_shape = x.shape
    D, Dp, Hp, th = params["D"], params["Dp"], params["Hp"], params["th"]
    rows = math.prod(x.shape[:-1])

    cfg_tm, _, cfg_vmem = _tpu_config()
    if tile_rows is None:
        tile_rows = cfg_tm
    if vmem_limit is None:
        vmem_limit = cfg_vmem

    # Row tiling: pad rows so the tile divides evenly; clamp tile to row count.
    rows_p = _round_up(rows, 8)
    tm = min(tile_rows, rows_p)

    # Shrink tm until the double-buffered working set fits the VMEM budget.
    x_bytes = jnp.dtype(x.dtype).itemsize

    def footprint(tm_):
        return (2 * (Dp * th + th * Dp) * 2            # bf16 weight double-buffers
                + 2 * tm_ * Dp * x_bytes               # x double-buffer
                + 2 * tm_ * Dp * x_bytes               # out double-buffer
                + tm_ * Dp * 4 + tm_ * Dp * 2          # acc (f32) + xn cache (bf16)
                + 4 * Dp * 4 + 2 * th * 4              # gamma/beta/b1/b2
                + (2 << 20))                           # slack

    while tm > 8 and footprint(tm) > vmem_limit:
        tm = max(8, _round_up(tm // 2, 8))
    rows_p = _round_up(rows_p, tm)

    x2 = x.reshape(rows, D)
    if rows_p != rows or Dp != D:
        x2 = jnp.pad(x2, ((0, rows_p - rows), (0, Dp - D)))

    grid = (rows_p // tm, Hp // th)

    out = pl.pallas_call(
        functools.partial(_ff_kernel, d_valid=D),
        out_shape=jax.ShapeDtypeStruct((rows_p, Dp), x.dtype),
        grid_spec=pltpu.PrefetchScalarGridSpec(
            num_scalar_prefetch=0,
            grid=grid,
            in_specs=[
                pl.BlockSpec((tm, Dp), lambda i, h: (i, 0)),   # x rows
                pl.BlockSpec((1, Dp), lambda i, h: (0, 0)),    # gamma
                pl.BlockSpec((1, Dp), lambda i, h: (0, 0)),    # beta
                pl.BlockSpec((Dp, th), lambda i, h: (0, h)),   # w1 (bf16)
                pl.BlockSpec((1, th), lambda i, h: (0, h)),    # b1
                pl.BlockSpec((th, Dp), lambda i, h: (h, 0)),   # w2 (bf16)
                pl.BlockSpec((1, Dp), lambda i, h: (0, 0)),    # b2
            ],
            out_specs=pl.BlockSpec((tm, Dp), lambda i, h: (i, 0)),
            scratch_shapes=[
                pltpu.VMEM((tm, Dp), jnp.float32),    # second-matmul accumulator
                pltpu.VMEM((tm, Dp), jnp.bfloat16),   # cached LayerNorm output
            ],
        ),
        compiler_params=pltpu.CompilerParams(
            dimension_semantics=("parallel", "arbitrary"),
            vmem_limit_bytes=vmem_limit,
        ),
    )(x2, params["gamma"], params["beta"], params["w1"], params["b1"],
      params["w2"], params["b2"])

    return out[:rows, :D].reshape(orig_shape)


def feedforward_ref(x, gamma, beta, w1, b1, w2, b2):
    """Pure-JAX f32 reference (matches PyTorch semantics)."""
    mean = jnp.mean(x, axis=-1, keepdims=True)
    var = jnp.mean((x - mean) ** 2, axis=-1, keepdims=True)
    xn = (x - mean) / jnp.sqrt(var + 1e-5) * gamma + beta
    h = xn @ w1 + b1
    h = 0.5 * h * (1.0 + lax.erf(h / jnp.sqrt(2.0)))
    return h @ w2 + b2


if __name__ == "__main__":
    # Small shapes consistent with the module: tokens of feature size `dim`.
    B, S, dim, hidden_dim = 2, 8, 32, 64

    key = jax.random.PRNGKey(0)
    kx, kw1, kb1, kw2, kb2 = jax.random.split(key, 5)

    x = jax.random.normal(kx, (B, S, dim), dtype=jnp.float32)

    # Deterministic synthetic parameters (same shapes as the nn.Module params).
    gamma = jnp.ones((dim,), dtype=jnp.float32)           # LayerNorm weight
    beta = jnp.zeros((dim,), dtype=jnp.float32)           # LayerNorm bias
    w1 = jax.random.normal(kw1, (dim, hidden_dim), dtype=jnp.float32) * 0.05
    b1 = jax.random.normal(kb1, (hidden_dim,), dtype=jnp.float32) * 0.01
    w2 = jax.random.normal(kw2, (hidden_dim, dim), dtype=jnp.float32) * 0.05
    b2 = jax.random.normal(kb2, (dim,), dtype=jnp.float32) * 0.01

    # Pad/cast parameters once (would be reused across many calls in a model).
    params = prepare_params(gamma, beta, w1, b1, w2, b2)

    out = feedforward_pallas(x, params)
    out = jax.block_until_ready(out)

    ref = feedforward_ref(x, gamma, beta, w1, b1, w2, b2)
    assert out.shape == (B, S, dim)
    # bf16 MXU inputs with f32 accumulation -> small drift vs f32 reference.
    assert jnp.allclose(out, ref, atol=2e-2, rtol=2e-2), "mismatch vs reference"
    assert jnp.isfinite(out).all()

    print("KERNEL_OK")
</pallas_src>

<mosaic_0001>
module attributes {stable_mosaic.version = 11 : i64} {
  func.func @_ff_kernel(%arg0: i32, %arg1: i32, %arg2: memref<16x128xf32, #tpu.memory_space<vmem>>, %arg3: memref<1x128xf32, #tpu.memory_space<vmem>>, %arg4: memref<1x128xf32, #tpu.memory_space<vmem>>, %arg5: memref<128x128xbf16, #tpu.memory_space<vmem>>, %arg6: memref<1x128xf32, #tpu.memory_space<vmem>>, %arg7: memref<128x128xbf16, #tpu.memory_space<vmem>>, %arg8: memref<1x128xf32, #tpu.memory_space<vmem>>, %arg9: memref<16x128xf32, #tpu.memory_space<vmem>>, %arg10: memref<16x128xf32, #tpu.memory_space<vmem>>, %arg11: memref<16x128xbf16, #tpu.memory_space<vmem>>) attributes {dimension_semantics = [#tpu.dimension_semantics<parallel>, #tpu.dimension_semantics<arbitrary>], iteration_bounds = array<i64: 1, 1>, scalar_prefetch = 0 : i64, scratch_operands = 2 : i64, tpu.core_type = #tpu.core_type<tc>, window_params = [{transform_indices = @transform_0, window_bounds = array<i64: 16, 128>}, {pipeline_mode = #tpu.pipeline_mode<synchronous>, transform_indices = @transform_1, window_bounds = array<i64: 1, 128>}, {pipeline_mode = #tpu.pipeline_mode<synchronous>, transform_indices = @transform_2, window_bounds = array<i64: 1, 128>}, {transform_indices = @transform_3, window_bounds = array<i64: 128, 128>}, {transform_indices = @transform_4, window_bounds = array<i64: 1, 128>}, {transform_indices = @transform_5, window_bounds = array<i64: 128, 128>}, {pipeline_mode = #tpu.pipeline_mode<synchronous>, transform_indices = @transform_6, window_bounds = array<i64: 1, 128>}, {transform_indices = @transform_7, window_bounds = array<i64: 16, 128>}]} {
    %c0_i32 = arith.constant 0 : i32
    %0 = arith.cmpi eq, %arg1, %c0_i32 : i32
    %1 = arith.extui %0 : i1 to i32
    %c0_i32_0 = arith.constant 0 : i32
    %2 = arith.cmpi ne, %1, %c0_i32_0 : i32
    scf.if %2 {
      %c0_18 = arith.constant 0 : index
      %c0_19 = arith.constant 0 : index
      %26 = vector.load %arg2[%c0_18, %c0_19] : memref<16x128xf32, #tpu.memory_space<vmem>>, vector<16x128xf32>
      %cst_20 = arith.constant dense<0.000000e+00> : vector<16xf32>
      %27 = vector.multi_reduction <add>, %26, %cst_20 [1] : vector<16x128xf32> to vector<16xf32>
      %28 = vector.shape_cast %27 : vector<16xf32> to vector<16x1xf32>
      %cst_21 = arith.constant 3.125000e-02 : f32
      %29 = vector.broadcast %cst_21 : f32 to vector<16x1xf32>
      %30 = arith.mulf %28, %29 : vector<16x1xf32>
      %31 = arith.mulf %26, %26 : vector<16x128xf32>
      %cst_22 = arith.constant dense<0.000000e+00> : vector<16xf32>
      %32 = vector.multi_reduction <add>, %31, %cst_22 [1] : vector<16x128xf32> to vector<16xf32>
      %33 = vector.shape_cast %32 : vector<16xf32> to vector<16x1xf32>
      %cst_23 = arith.constant 3.125000e-02 : f32
      %34 = vector.broadcast %cst_23 : f32 to vector<16x1xf32>
      %35 = arith.mulf %33, %34 : vector<16x1xf32>
      %36 = arith.mulf %30, %30 : vector<16x1xf32>
      %37 = arith.subf %35, %36 : vector<16x1xf32>
      %38 = vector.broadcast %30 : vector<16x1xf32> to vector<16x128xf32>
      %39 = arith.subf %26, %38 : vector<16x128xf32>
      %cst_24 = arith.constant 9.99999974E-6 : f32
      %40 = vector.broadcast %cst_24 : f32 to vector<16x1xf32>
      %41 = arith.addf %37, %40 : vector<16x1xf32>
      %42 = math.rsqrt %41 : vector<16x1xf32>
      %43 = vector.broadcast %42 : vector<16x1xf32> to vector<16x128xf32>
      %44 = arith.mulf %39, %43 : vector<16x128xf32>
      %c0_25 = arith.constant 0 : index
      %c0_26 = arith.constant 0 : index
      %45 = vector.load %arg3[%c0_25, %c0_26] : memref<1x128xf32, #tpu.memory_space<vmem>>, vector<1x128xf32>
      %46 = vector.broadcast %45 : vector<1x128xf32> to vector<16x128xf32>
      %47 = arith.mulf %44, %46 : vector<16x128xf32>
      %c0_27 = arith.constant 0 : index
      %c0_28 = arith.constant 0 : index
      %48 = vector.load %arg4[%c0_27, %c0_28] : memref<1x128xf32, #tpu.memory_space<vmem>>, vector<1x128xf32>
      %49 = vector.broadcast %48 : vector<1x128xf32> to vector<16x128xf32>
      %50 = arith.addf %47, %49 : vector<16x128xf32>
      %51 = arith.truncf %50 : vector<16x128xf32> to vector<16x128xbf16>
      %c0_29 = arith.constant 0 : index
      %c0_30 = arith.constant 0 : index
      %52 = vector.load %arg11[%c0_29, %c0_30] : memref<16x128xbf16, #tpu.memory_space<vmem>>, vector<16x128xbf16>
      tpu.vector_store %arg11[%c0_29, %c0_30], %51 {strides = array<i32>} : memref<16x128xbf16, #tpu.memory_space<vmem>>, vector<16x128xbf16>,
      %cst_31 = arith.constant 0.000000e+00 : f32
      %53 = vector.broadcast %cst_31 : f32 to vector<16x128xf32>
      %c0_32 = arith.constant 0 : index
      %c0_33 = arith.constant 0 : index
      %54 = vector.load %arg10[%c0_32, %c0_33] : memref<16x128xf32, #tpu.memory_space<vmem>>, vector<16x128xf32>
      tpu.vector_store %arg10[%c0_32, %c0_33], %53 {strides = array<i32>} : memref<16x128xf32, #tpu.memory_space<vmem>>, vector<16x128xf32>,
    } else {
    }
    %c0 = arith.constant 0 : index
    %c0_1 = arith.constant 0 : index
    %3 = vector.load %arg11[%c0, %c0_1] : memref<16x128xbf16, #tpu.memory_space<vmem>>, vector<16x128xbf16>
    %c0_2 = arith.constant 0 : index
    %c0_3 = arith.constant 0 : index
    %4 = vector.load %arg5[%c0_2, %c0_3] : memref<128x128xbf16, #tpu.memory_space<vmem>>, vector<128x128xbf16>
    %cst = arith.constant dense<0.000000e+00> : vector<16x128xf32>
    %5 = tpu.matmul %3, %4, %cst {dimension_numbers = #tpu.dot_dimension_numbers<[1], [0], [0], [1], [0, 0, 1, 1], [], []>} : vector<16x128xbf16>, vector<128x128xbf16>, vector<16x128xf32> -> vector<16x128xf32>
    %c0_4 = arith.constant 0 : index
    %c0_5 = arith.constant 0 : index
    %6 = vector.load %arg6[%c0_4, %c0_5] : memref<1x128xf32, #tpu.memory_space<vmem>>, vector<1x128xf32>
    %7 = vector.broadcast %6 : vector<1x128xf32> to vector<16x128xf32>
    %8 = arith.addf %5, %7 : vector<16x128xf32>
    %cst_6 = arith.constant 5.000000e-01 : f32
    %9 = vector.broadcast %cst_6 : f32 to vector<16x128xf32>
    %10 = arith.mulf %9, %8 : vector<16x128xf32>
    %cst_7 = arith.constant 0.707106769 : f32
    %11 = vector.broadcast %cst_7 : f32 to vector<16x128xf32>
    %12 = arith.mulf %8, %11 : vector<16x128xf32>
    %13 = math.erf %12 : vector<16x128xf32>
    %cst_8 = arith.constant 1.000000e+00 : f32
    %14 = vector.broadcast %cst_8 : f32 to vector<16x128xf32>
    %15 = arith.addf %14, %13 : vector<16x128xf32>
    %16 = arith.mulf %10, %15 : vector<16x128xf32>
    %c0_9 = arith.constant 0 : index
    %c0_10 = arith.constant 0 : index
    %17 = vector.load %arg10[%c0_9, %c0_10] : memref<16x128xf32, #tpu.memory_space<vmem>>, vector<16x128xf32>
    %18 = arith.truncf %16 : vector<16x128xf32> to vector<16x128xbf16>
    %c0_11 = arith.constant 0 : index
    %c0_12 = arith.constant 0 : index
    %19 = vector.load %arg7[%c0_11, %c0_12] : memref<128x128xbf16, #tpu.memory_space<vmem>>, vector<128x128xbf16>
    %cst_13 = arith.constant dense<0.000000e+00> : vector<16x128xf32>
    %20 = tpu.matmul %18, %19, %cst_13 {dimension_numbers = #tpu.dot_dimension_numbers<[1], [0], [0], [1], [0, 0, 1, 1], [], []>} : vector<16x128xbf16>, vector<128x128xbf16>, vector<16x128xf32> -> vector<16x128xf32>
    %21 = arith.addf %17, %20 : vector<16x128xf32>
    %c0_14 = arith.constant 0 : index
    %c0_15 = arith.constant 0 : index
    %22 = vector.load %arg10[%c0_14, %c0_15] : memref<16x128xf32, #tpu.memory_space<vmem>>, vector<16x128xf32>
    tpu.vector_store %arg10[%c0_14, %c0_15], %21 {strides = array<i32>} : memref<16x128xf32, #tpu.memory_space<vmem>>, vector<16x128xf32>,
    %c0_i32_16 = arith.constant 0 : i32
    %23 = arith.cmpi eq, %arg1, %c0_i32_16 : i32
    %24 = arith.extui %23 : i1 to i32
    %c0_i32_17 = arith.constant 0 : i32
    %25 = arith.cmpi ne, %24, %c0_i32_17 : i32
    scf.if %25 {
      %c0_18 = arith.constant 0 : index
      %c0_19 = arith.constant 0 : index
      %26 = vector.load %arg10[%c0_18, %c0_19] : memref<16x128xf32, #tpu.memory_space<vmem>>, vector<16x128xf32>
      %c0_20 = arith.constant 0 : index
      %c0_21 = arith.constant 0 : index
      %27 = vector.load %arg8[%c0_20, %c0_21] : memref<1x128xf32, #tpu.memory_space<vmem>>, vector<1x128xf32>
      %28 = vector.broadcast %27 : vector<1x128xf32> to vector<16x128xf32>
      %29 = arith.addf %26, %28 : vector<16x128xf32>
      %c0_22 = arith.constant 0 : index
      %c0_23 = arith.constant 0 : index
      %30 = vector.load %arg9[%c0_22, %c0_23] : memref<16x128xf32, #tpu.memory_space<vmem>>, vector<16x128xf32>
      tpu.vector_store %arg9[%c0_22, %c0_23], %29 {strides = array<i32>} : memref<16x128xf32, #tpu.memory_space<vmem>>, vector<16x128xf32>,
    } else {
    }
    return
  }
  func.func @transform_0(%arg0: i32, %arg1: i32) -> (i32, i32) {
    %c0_i32 = arith.constant 0 : i32
    %c0_i32_0 = arith.constant 0 : i32
    return %arg0, %c0_i32 : i32, i32
  }
  func.func @transform_1(%arg0: i32, %arg1: i32) -> (i32, i32) {
    %c0_i32 = arith.constant 0 : i32
    %c0_i32_0 = arith.constant 0 : i32
    %c0_i32_1 = arith.constant 0 : i32
    return %c0_i32, %c0_i32_0 : i32, i32
  }
  func.func @transform_2(%arg0: i32, %arg1: i32) -> (i32, i32) {
    %c0_i32 = arith.constant 0 : i32
    %c0_i32_0 = arith.constant 0 : i32
    %c0_i32_1 = arith.constant 0 : i32
    return %c0_i32, %c0_i32_0 : i32, i32
  }
  func.func @transform_3(%arg0: i32, %arg1: i32) -> (i32, i32) {
    %c0_i32 = arith.constant 0 : i32
    %c0_i32_0 = arith.constant 0 : i32
    return %c0_i32, %arg1 : i32, i32
  }
  func.func @transform_4(%arg0: i32, %arg1: i32) -> (i32, i32) {
    %c0_i32 = arith.constant 0 : i32
    %c0_i32_0 = arith.constant 0 : i32
    return %c0_i32, %arg1 : i32, i32
  }
  func.func @transform_5(%arg0: i32, %arg1: i32) -> (i32, i32) {
    %c0_i32 = arith.constant 0 : i32
    %c0_i32_0 = arith.constant 0 : i32
    return %arg1, %c0_i32 : i32, i32
  }
  func.func @transform_6(%arg0: i32, %arg1: i32) -> (i32, i32) {
    %c0_i32 = arith.constant 0 : i32
    %c0_i32_0 = arith.constant 0 : i32
    %c0_i32_1 = arith.constant 0 : i32
    return %c0_i32, %c0_i32_0 : i32, i32
  }
  func.func @transform_7(%arg0: i32, %arg1: i32) -> (i32, i32) {
    %c0_i32 = arith.constant 0 : i32
    %c0_i32_0 = arith.constant 0 : i32
    return %arg0, %c0_i32 : i32, i32
  }
}

</mosaic_0001>

<llo_original>
// kernel: tpu_custom_call.1
$region0: #{tpu_custom_call.1}
  #allocation0 [shape = 'u32[]', space=smem, size = 0x4, offset = 0x4, fixed_abs, tag = 'smem constant byte address 0x4 - core index']
  #allocation1 [shape = 'u32[144,128]{1,0:T(1,128)}', space=vmem, size = 0x12000, scoped, tag = 'internal scratch']
  #allocation2 [shape = 'f32[16,128]{1,0:T(8,128)}', space=vmem, size = 0x2000, scoped, tag = 'scratch operand']
  #allocation3 [shape = 'bf16[16,128]{1,0:T(8,128)(2,1)}', space=vmem, size = 0x1000, scoped, tag = 'scratch operand']
  %s0 = inlined_call_operand.hbm [shape: f32[16,128], index: 0, kind: input, shape index: {}]
  %s1 = inlined_call_operand.vmem [shape: f32[1,128], index: 1, kind: input, shape index: {}]
  %s2 = inlined_call_operand.vmem [shape: f32[1,128], index: 2, kind: input, shape index: {}]
  %s3 = inlined_call_operand.hbm [shape: bf16[128,128], index: 3, kind: input, shape index: {}]
  %s4 = inlined_call_operand.vmem [shape: f32[1,128], index: 4, kind: input, shape index: {}]
  %s5 = inlined_call_operand.hbm [shape: bf16[128,128], index: 5, kind: input, shape index: {}]
  %s6 = inlined_call_operand.vmem [shape: f32[1,128], index: 6, kind: input, shape index: {}]
  %s7 = inlined_call_operand.hbm [shape: f32[16,128], index: 7, kind: output, shape index: {}]
  %s8 = sld [smem:[#allocation0]]
  $region58: #{tpu_custom_call.1} parent=0
    _
  %s10 = ssub.s32 1, %s8
  %s11 = scalar_select 0, %s10, %s8
  $region1: #{tpu_custom_call.1} parent=0
    #allocation4 [shape = 'u8[8192]{0}', space=vmem, size = 0x2000, scoped, tag = 'input window, operand 0, single buffered']
    #allocation5 [shape = 's32[1]{0}', space=sflag, size = 0x4, scoped, tag = 'scoped memory for tpu_custom_call.1']
    #allocation6 [shape = 's32[1]{0}', space=sflag, size = 0x4, scoped, tag = 'scoped memory for tpu_custom_call.1']
    #allocation7 [shape = 'u8[32768]{0}', space=vmem, size = 0x8000, scoped, tag = 'input window, operand 3, single buffered']
    #allocation8 [shape = 's32[1]{0}', space=sflag, size = 0x4, scoped, tag = 'scoped memory for tpu_custom_call.1']
    #allocation9 [shape = 'u8[32768]{0}', space=vmem, size = 0x8000, scoped, tag = 'input window, operand 5, single buffered']
    #allocation10 [shape = 'u8[8192]{0}', space=vmem, size = 0x2000, scoped, tag = 'output window, operand 0, single buffered']
    %12 = vsyncpa [#allocation5], 0
    %13 = vsyncpa [#allocation8], 0
    %14 = vsyncpa [#allocation6], 0
    // Predicated region
    $region2: #{tpu_custom_call.1} parent=1 // pred_check
      _
    $region3: #{tpu_custom_call.1} parent=1 // pred_check_branch
      %16 = sbr.rel (0) target = $region5
    $region4: #{tpu_custom_call.1} parent=1 // pred_region
      %s18 = ssub.s32 256, 256
      %19 = vsyncadd [#allocation5], %s18
      %s20 = sshll.u32 [#allocation4], 4
      %s21 = int_to_ptr.vmem [resolvable:$true] %s20
      %26 = dma.hbm_to_vmem [thread:$0]  %s0, 256, %s21, [#allocation5], 128, 128, 8
    $region5: #{tpu_custom_call.1} parent=1 // pred_fallthru
      _
    // Predicated region
    $region6: #{tpu_custom_call.1} parent=1 // pred_check
      _
    $region7: #{tpu_custom_call.1} parent=1 // pred_check_branch
      %28 = sbr.rel (0) target = $region9
    $region8: #{tpu_custom_call.1} parent=1 // pred_region
      _
    $region9: #{tpu_custom_call.1} parent=1 // pred_fallthru
      _
    // Predicated region
    $region10: #{tpu_custom_call.1} parent=1 // pred_check
      _
    $region11: #{tpu_custom_call.1} parent=1 // pred_check_branch
      %30 = sbr.rel (0) target = $region13
    $region12: #{tpu_custom_call.1} parent=1 // pred_region
      _
    $region13: #{tpu_custom_call.1} parent=1 // pred_fallthru
      _
    // Predicated region
    $region14: #{tpu_custom_call.1} parent=1 // pred_check
      _
    $region15: #{tpu_custom_call.1} parent=1 // pred_check_branch
      %32 = sbr.rel (0) target = $region17
    $region16: #{tpu_custom_call.1} parent=1 // pred_region
      %s34 = ssub.s32 1024, 1024
      %35 = vsyncadd [#allocation8], %s34
      %s36 = sshll.u32 [#allocation7], 4
      %s37 = int_to_ptr.vmem [resolvable:$true] %s36
      %42 = dma.hbm_to_vmem [thread:$0]  %s3, 1024, %s37, [#allocation8], 64, 64, 4
    $region17: #{tpu_custom_call.1} parent=1 // pred_fallthru
      _
    // Predicated region
    $region18: #{tpu_custom_call.1} parent=1 // pred_check
      _
    $region19: #{tpu_custom_call.1} parent=1 // pred_check_branch
      %44 = sbr.rel (0) target = $region21
    $region20: #{tpu_custom_call.1} parent=1 // pred_region
      _
    $region21: #{tpu_custom_call.1} parent=1 // pred_fallthru
      _
    // Predicated region
    $region22: #{tpu_custom_call.1} parent=1 // pred_check
      _
    $region23: #{tpu_custom_call.1} parent=1 // pred_check_branch
      %46 = sbr.rel (0) target = $region25
    $region24: #{tpu_custom_call.1} parent=1 // pred_region
      %s48 = ssub.s32 1024, 1024
      %49 = vsyncadd [#allocation8], %s48
      %s50 = sshll.u32 [#allocation9], 4
      %s51 = int_to_ptr.vmem [resolvable:$true] %s50
      %56 = dma.hbm_to_vmem [thread:$0]  %s5, 1024, %s51, [#allocation8], 64, 64, 4
    $region25: #{tpu_custom_call.1} parent=1 // pred_fallthru
      _
    // Predicated region
    $region26: #{tpu_custom_call.1} parent=1 // pred_check
      _
    $region27: #{tpu_custom_call.1} parent=1 // pred_check_branch
      %58 = sbr.rel (0) target = $region29
    $region28: #{tpu_custom_call.1} parent=1 // pred_region
      _
    $region29: #{tpu_custom_call.1} parent=1 // pred_fallthru
      _
    // Predicated region
    $region30: #{tpu_custom_call.1} parent=1 // pred_check
      _
    $region31: #{tpu_custom_call.1} parent=1 // pred_check_branch
      %60 = sbr.rel (0) target = $region33
    $region32: #{tpu_custom_call.1} parent=1 // pred_region
      %61 = dma.done [#allocation5], 256
    $region33: #{tpu_custom_call.1} parent=1 // pred_fallthru
      _
    // Predicated region
    $region34: #{tpu_custom_call.1} parent=1 // pred_check
      _
    $region35: #{tpu_custom_call.1} parent=1 // pred_check_branch
      %63 = sbr.rel (0) target = $region37
    $region36: #{tpu_custom_call.1} parent=1 // pred_region
      %64 = dma.done [#allocation8], 1024
    $region37: #{tpu_custom_call.1} parent=1 // pred_fallthru
      _
    // Predicated region
    $region38: #{tpu_custom_call.1} parent=1 // pred_check
      _
    $region39: #{tpu_custom_call.1} parent=1 // pred_check_branch
      %66 = sbr.rel (0) target = $region41
    $region40: #{tpu_custom_call.1} parent=1 // pred_region
      %67 = dma.done [#allocation8], 1024
    $region41: #{tpu_custom_call.1} parent=1 // pred_fallthru
      _
    %p69 = scmp.eq.s32.totalorder 0, 0
    // Predicated region
    $region42: #{tpu_custom_call.1} parent=1 // pred_check
      %p70 = pneg %p69
    $region43: #{tpu_custom_call.1} parent=1 // pred_check_branch
      %72 = sbr.rel (%p70) target = $region45
    $region44: #{tpu_custom_call.1} parent=1 // pred_region
      %v73 = vld [vmem:[#allocation4] sm:$0xff]
      %v74 = vld [vmem:[#allocation4 + $0x8] sm:$0xff]
      %75 = vadd.xlane.f32.xlu0 %v73
      %v76 = vpop.xlane.xlu0 %75
      %77 = vadd.xlane.f32.xlu0 %v74
      %v78 = vpop.xlane.xlu0 %77
      %v79 = vmul.f32 %v76, 0.03125
      %v80 = vmul.f32 %v78, 0.03125
      %v81 = vmul.f32 %v73, %v73
      %v82 = vmul.f32 %v74, %v74
      %83 = vadd.xlane.f32.xlu0 %v81
      %v84 = vpop.xlane.xlu0 %83
      %85 = vadd.xlane.f32.xlu0 %v82
      %v86 = vpop.xlane.xlu0 %85
      %v87 = vmul.f32 %v84, 0.03125
      %v88 = vmul.f32 %v86, 0.03125
      %v89 = vmul.f32 %v79, %v79
      %v90 = vmul.f32 %v80, %v80
      %v91 = vsub.f32 %v87, %v89
      %v92 = vsub.f32 %v88, %v90
      %v93 = vsub.f32 %v73, %v79
      %v94 = vsub.f32 %v74, %v80
      %v95 = vadd.f32 %v91, 1e-05
      %v96 = vadd.f32 %v92, 1e-05
      %v97 = vrsqrt.pop %v95
      %v98 = vrsqrt.pop %v96
      %v99 = vmul.f32 %v93, %v97
      %v100 = vmul.f32 %v94, %v98
      %v101 = vld [vmem:[%s1] sm:$0x1]
      %v103 = vlaneseq
      %v104 = vshrl.u32 %v103, 7
      %v105 = vsub.s32 0, %v104
      %v106 = vrot.slane %v101, %v105
      %v108 = vmul.f32 %v99, %v106
      %v109 = vmul.f32 %v100, %v106
      %v110 = vld [vmem:[%s2] sm:$0x1]
      %v112 = vlaneseq
      %v113 = vshrl.u32 %v112, 7
      %v114 = vsub.s32 0, %v113
      %v115 = vrot.slane %v110, %v114
      %v117 = vadd.f32 %v108, %v115
      %v118 = vadd.f32 %v109, %v115
      %v119 = vpack.c.bf16 %v118, %v117
      %v121 = vunpack.c.l.b16 %v119
      %v122 = vunpack.c.h.b16 %v119
      %v123 = vpack.c.b16 %v121, %v121
      %v124 = vpack.c.b16 %v122, %v122
      %127 = vst [vmem:[#allocation3] sm:$0xf] %v123
      %128 = vst [vmem:[#allocation3 + $0x4] sm:$0xf] %v124
      %129 = vst [vmem:[#allocation2] sm:$0xff] 0.0
      %130 = vst [vmem:[#allocation2 + $0x8] sm:$0xff] 0.0
    $region45: #{tpu_custom_call.1} parent=1 // pred_fallthru
      _
    %v131 = vld [vmem:[#allocation3] sm:$0xf]
    %v132 = vld [vmem:[#allocation3 + $0x4] sm:$0xf]
    %v133 = vld [vmem:[#allocation7] sm:$0xf]
    %v134 = vld [vmem:[#allocation7 + $0x4] sm:$0xf]
    %v135 = vld [vmem:[#allocation7 + $0x8] sm:$0xf]
    %v136 = vld [vmem:[#allocation7 + $0xc] sm:$0xf]
    %v137 = vld [vmem:[#allocation7 + $0x10] sm:$0xf]
    %v138 = vld [vmem:[#allocation7 + $0x14] sm:$0xf]
    %v139 = vld [vmem:[#allocation7 + $0x18] sm:$0xf]
    %v140 = vld [vmem:[#allocation7 + $0x1c] sm:$0xf]
    %v141 = vld [vmem:[#allocation7 + $0x20] sm:$0xf]
    %v142 = vld [vmem:[#allocation7 + $0x24] sm:$0xf]
    %v143 = vld [vmem:[#allocation7 + $0x28] sm:$0xf]
    %v144 = vld [vmem:[#allocation7 + $0x2c] sm:$0xf]
    %v145 = vld [vmem:[#allocation7 + $0x30] sm:$0xf]
    %v146 = vld [vmem:[#allocation7 + $0x34] sm:$0xf]
    %v147 = vld [vmem:[#allocation7 + $0x38] sm:$0xf]
    %v148 = vld [vmem:[#allocation7 + $0x3c] sm:$0xf]
    %v149 = vld [vmem:[%s4] sm:$0x1]
    %v151 = vlaneseq
    %v152 = vshrl.u32 %v151, 7
    %v153 = vsub.s32 0, %v152
    %v154 = vrot.slane %v149, %v153
    %v158 = vunpack.c.l.b16 %v131
    %v159 = vunpack.c.l.b16 %v132
    %v160 = vpack.c.b16 %v159, %v158
    %v178 = vunpack.c.l.b16 %v133
    %v179 = vunpack.c.l.b16 %v134
    %v180 = vunpack.c.l.b16 %v135
    %v181 = vunpack.c.l.b16 %v136
    %v182 = vunpack.c.l.b16 %v137
    %v183 = vunpack.c.l.b16 %v138
    %v184 = vunpack.c.l.b16 %v139
    %v185 = vunpack.c.l.b16 %v140
    %v186 = vunpack.c.l.b16 %v141
    %v187 = vunpack.c.l.b16 %v142
    %v188 = vunpack.c.l.b16 %v143
    %v189 = vunpack.c.l.b16 %v144
    %v190 = vunpack.c.l.b16 %v145
    %v191 = vunpack.c.l.b16 %v146
    %v192 = vunpack.c.l.b16 %v147
    %v193 = vunpack.c.l.b16 %v148
    %v194 = vpack.c.b16 %v179, %v178
    %v195 = vpack.c.b16 %v181, %v180
    %v196 = vpack.c.b16 %v183, %v182
    %v197 = vpack.c.b16 %v185, %v184
    %v198 = vpack.c.b16 %v187, %v186
    %v199 = vpack.c.b16 %v189, %v188
    %v200 = vpack.c.b16 %v191, %v190
    %v201 = vpack.c.b16 %v193, %v192
    %210 = vmatprep.subr.bf16.mxu0 0
    %211 = vmatpush1.bf16.msra.mxu0 %v201
    %212 = vmatprep.subr.bf16.mxu0 0
    %213 = vmatpush1.bf16.msra.mxu0 %v200
    %214 = vmatprep.subr.bf16.mxu0 0
    %215 = vmatpush1.bf16.msra.mxu0 %v199
    %216 = vmatprep.subr.bf16.mxu0 0
    %217 = vmatpush1.bf16.msra.mxu0 %v198
    %218 = vmatprep.subr.bf16.mxu0 0
    %219 = vmatpush1.bf16.msra.mxu0 %v197
    %220 = vmatprep.subr.bf16.mxu0 0
    %221 = vmatpush1.bf16.msra.mxu0 %v196
    %222 = vmatprep.subr.bf16.mxu0 0
    %223 = vmatpush1.bf16.msra.mxu0 %v195
    %224 = vmatprep.subr.bf16.mxu0 0
    %225 = vmatpush1.bf16.msra.mxu0 %v194
    %226 = vmatprep.subr.bf16.mxu0 0
    %227 = vmatpush2.bf16.msra.mxu0 0
    %228 = vmatprep.subr.bf16.mxu0 0
    %229 = vmatpush2.bf16.msra.mxu0 0
    %230 = vmatprep.subr.bf16.mxu0 0
    %231 = vmatpush2.bf16.msra.mxu0 0
    %232 = vmatprep.subr.bf16.mxu0 0
    %233 = vmatpush2.bf16.msra.mxu0 0
    %234 = vmatprep.subr.bf16.mxu0 0
    %235 = vmatpush2.bf16.msra.mxu0 0
    %236 = vmatprep.subr.bf16.mxu0 0
    %237 = vmatpush2.bf16.msra.mxu0 0
    %238 = vmatprep.subr.bf16.mxu0 0
    %239 = vmatpush2.bf16.msra.mxu0 0
    %240 = vmatprep.subr.bf16.mxu0 0
    %241 = vmatpush2.bf16.msra.mxu0 0
    %242 = vmatprep.mubr.bf16.mxu0 0
    %243 = vmatmul.mubr.bf16.gmra.mxu0 %v160
    %v244 = vpop.f32.mrf.mxu0
    %v245 = vadd.f32 %v154, %v244
    %v246 = vpop.f32.mrf.mxu0
    %v247 = vpop.f32.mrf.mxu0
    %v248 = vadd.f32 %v154, %v247
    %v249 = vpop.f32.mrf.mxu0
    %250 = vdwg.mxu0
    %v251 = vmul.f32 %v245, 0.5
    %v252 = vmul.f32 %v248, 0.5
    %v253 = vmul.f32 %v245, 0.70710677
    %v254 = vmul.f32 %v248, 0.70710677
    %v255 = verf.f32.pop %v253
    %v256 = verf.f32.pop %v254
    %v257 = vadd.f32 %v255, 1.0
    %v258 = vadd.f32 %v256, 1.0
    %v259 = vmul.f32 %v251, %v257
    %v260 = vmul.f32 %v252, %v258
    %v261 = vld [vmem:[#allocation2] sm:$0xff]
    %v262 = vld [vmem:[#allocation2 + $0x8] sm:$0xff]
    %v263 = vpack.c.bf16 %v260, %v259
    %v264 = vld [vmem:[#allocation9] sm:$0xf]
    %v265 = vld [vmem:[#allocation9 + $0x4] sm:$0xf]
    %v266 = vld [vmem:[#allocation9 + $0x8] sm:$0xf]
    %v267 = vld [vmem:[#allocation9 + $0xc] sm:$0xf]
    %v268 = vld [vmem:[#allocation9 + $0x10] sm:$0xf]
    %v269 = vld [vmem:[#allocation9 + $0x14] sm:$0xf]
    %v270 = vld [vmem:[#allocation9 + $0x18] sm:$0xf]
    %v271 = vld [vmem:[#allocation9 + $0x1c] sm:$0xf]
    %v272 = vld [vmem:[#allocation9 + $0x20] sm:$0xf]
    %v273 = vld [vmem:[#allocation9 + $0x24] sm:$0xf]
    %v274 = vld [vmem:[#allocation9 + $0x28] sm:$0xf]
    %v275 = vld [vmem:[#allocation9 + $0x2c] sm:$0xf]
    %v276 = vld [vmem:[#allocation9 + $0x30] sm:$0xf]
    %v277 = vld [vmem:[#allocation9 + $0x34] sm:$0xf]
    %v278 = vld [vmem:[#allocation9 + $0x38] sm:$0xf]
    %v279 = vld [vmem:[#allocation9 + $0x3c] sm:$0xf]
    %v296 = vunpack.c.l.b16 %v264
    %v297 = vunpack.c.l.b16 %v265
    %v298 = vunpack.c.l.b16 %v266
    %v299 = vunpack.c.l.b16 %v267
    %v300 = vunpack.c.l.b16 %v268
    %v301 = vunpack.c.l.b16 %v269
    %v302 = vunpack.c.l.b16 %v270
    %v303 = vunpack.c.l.b16 %v271
    %v304 = vunpack.c.l.b16 %v272
    %v305 = vunpack.c.l.b16 %v273
    %v306 = vunpack.c.l.b16 %v274
    %v307 = vunpack.c.l.b16 %v275
    %v308 = vunpack.c.l.b16 %v276
    %v309 = vunpack.c.l.b16 %v277
    %v310 = vunpack.c.l.b16 %v278
    %v311 = vunpack.c.l.b16 %v279
    %v312 = vpack.c.b16 %v297, %v296
    %v313 = vpack.c.b16 %v299, %v298
    %v314 = vpack.c.b16 %v301, %v300
    %v315 = vpack.c.b16 %v303, %v302
    %v316 = vpack.c.b16 %v305, %v304
    %v317 = vpack.c.b16 %v307, %v306
    %v318 = vpack.c.b16 %v309, %v308
    %v319 = vpack.c.b16 %v311, %v310
    %328 = vmatprep.subr.bf16.mxu0 0
    %329 = vmatpush1.bf16.msra.mxu0 %v319
    %330 = vmatprep.subr.bf16.mxu0 0
    %331 = vmatpush1.bf16.msra.mxu0 %v318
    %332 = vmatprep.subr.bf16.mxu0 0
    %333 = vmatpush1.bf16.msra.mxu0 %v317
    %334 = vmatprep.subr.bf16.mxu0 0
    %335 = vmatpush1.bf16.msra.mxu0 %v316
    %336 = vmatprep.subr.bf16.mxu0 0
    %337 = vmatpush1.bf16.msra.mxu0 %v315
    %338 = vmatprep.subr.bf16.mxu0 0
    %339 = vmatpush1.bf16.msra.mxu0 %v314
    %340 = vmatprep.subr.bf16.mxu0 0
    %341 = vmatpush1.bf16.msra.mxu0 %v313
    %342 = vmatprep.subr.bf16.mxu0 0
    %343 = vmatpush1.bf16.msra.mxu0 %v312
    %344 = vmatprep.subr.bf16.mxu0 0
    %345 = vmatpush2.bf16.msra.mxu0 0
    %346 = vmatprep.subr.bf16.mxu0 0
    %347 = vmatpush2.bf16.msra.mxu0 0
    %348 = vmatprep.subr.bf16.mxu0 0
    %349 = vmatpush2.bf16.msra.mxu0 0
    %350 = vmatprep.subr.bf16.mxu0 0
    %351 = vmatpush2.bf16.msra.mxu0 0
    %352 = vmatprep.subr.bf16.mxu0 0
    %353 = vmatpush2.bf16.msra.mxu0 0
    %354 = vmatprep.subr.bf16.mxu0 0
    %355 = vmatpush2.bf16.msra.mxu0 0
    %356 = vmatprep.subr.bf16.mxu0 0
    %357 = vmatpush2.bf16.msra.mxu0 0
    %358 = vmatprep.subr.bf16.mxu0 0
    %359 = vmatpush2.bf16.msra.mxu0 0
    %360 = vmatprep.mubr.bf16.mxu0 0
    %361 = vmatmul.mubr.bf16.gmra.mxu0 %v263
    %v362 = vpop.f32.mrf.mxu0
    %v363 = vadd.f32 0.0, %v362
    %v364 = vpop.f32.mrf.mxu0
    %v365 = vpop.f32.mrf.mxu0
    %v366 = vadd.f32 0.0, %v365
    %v367 = vpop.f32.mrf.mxu0
    %368 = vdwg.mxu0
    %v369 = vadd.f32 %v261, %v363
    %v370 = vadd.f32 %v262, %v366
    %371 = vst [vmem:[#allocation2] sm:$0xff] %v369
    %372 = vst [vmem:[#allocation2 + $0x8] sm:$0xff] %v370
    // Predicated region
    $region46: #{tpu_custom_call.1} parent=1 // pred_check
      %p373 = pneg %p69
    $region47: #{tpu_custom_call.1} parent=1 // pred_check_branch
      %375 = sbr.rel (%p373) target = $region49
    $region48: #{tpu_custom_call.1} parent=1 // pred_region
      %v376 = vld [vmem:[#allocation2] sm:$0xff]
      %v377 = vld [vmem:[#allocation2 + $0x8] sm:$0xff]
      %v378 = vld [vmem:[%s6] sm:$0x1]
      %v380 = vlaneseq
      %v381 = vshrl.u32 %v380, 7
      %v382 = vsub.s32 0, %v381
      %v383 = vrot.slane %v378, %v382
      %v385 = vadd.f32 %v376, %v383
      %v386 = vadd.f32 %v377, %v383
      %387 = vst [vmem:[#allocation10] sm:$0xff] %v385
      %388 = vst [vmem:[#allocation10 + $0x8] sm:$0xff] %v386
    $region49: #{tpu_custom_call.1} parent=1 // pred_fallthru
      _
    // Predicated region
    $region50: #{tpu_custom_call.1} parent=1 // pred_check
      _
    $region51: #{tpu_custom_call.1} parent=1 // pred_check_branch
      %390 = sbr.rel (0) target = $region53
    $region52: #{tpu_custom_call.1} parent=1 // pred_region
      %s392 = ssub.s32 256, 256
      %393 = vsyncadd [#allocation6], %s392
      %s394 = sshll.u32 [#allocation10], 4
      %s395 = int_to_ptr.vmem [resolvable:$true] %s394
      %400 = dma.vmem_to_hbm [thread:$0]  %s395, 256, %s7, [#allocation6], 128, 128, 8
    $region53: #{tpu_custom_call.1} parent=1 // pred_fallthru
      _
    // Predicated region
    $region54: #{tpu_custom_call.1} parent=1 // pred_check
      _
    $region55: #{tpu_custom_call.1} parent=1 // pred_check_branch
      %402 = sbr.rel (0) target = $region57
    $region56: #{tpu_custom_call.1} parent=1 // pred_region
      %403 = dma.done [#allocation6], 256
    $region57: #{tpu_custom_call.1} parent=1 // pred_fallthru
      _
    %404 = vsyncpa [#allocation5], 1
    %405 = vsyncpa [#allocation8], 1
    %406 = vsyncpa [#allocation6], 1

</llo_original>
